<compile_context>
chip_gen: v5e
topology: v5e:2x2
jax: 0.10.0
libtpu: 0.0.40
codegen_flags: <defaults>
</compile_context>

<pallas_src>
import functools

import jax
import jax.numpy as jnp
from jax import lax
from jax.experimental import pallas as pl
from jax.experimental.pallas import tpu as pltpu


# ----------------------------------------------------------------------------
# Pallas kernel: fused LSTM + vanilla-RNN recurrences + folded head
# ----------------------------------------------------------------------------
def lstm_rnn_kernel(
    x_ref,           # (T*Bp, F)       time-major, batch-minor flattened input
    w_ih_l_ref,      # (F, 4H)         LSTM input weights (transposed)
    w_hh_l_ref,      # (H, 4H)         LSTM hidden weights (transposed)
    b_l_ref,         # (1, 4H)         LSTM bias (b_ih + b_hh)
    w_ih_r_ref,      # (F, Hr)         RNN input weights (transposed)
    w_hh_r_ref,      # (Hr, Hr)        RNN hidden weights (transposed)
    b_r_ref,         # (1, Hr)         RNN bias (b_ih + b_hh)
    w_head_l_ref,    # (T*H, Np)       fc_lstm folded with fc_last, lane-padded
    w_head_r_ref,    # (Hr, Np)        fc_rnn  folded with fc_last, lane-padded
    b_head_ref,      # (1, Np)         folded bias, lane-padded
    out_ref,         # (Bp, Np)        lane-dense padded output
    *,
    seq_len,
    batch_padded,
    hidden_lstm,
    hidden_rnn,
):
    T, Bp = seq_len, batch_padded
    H, Hr = hidden_lstm, hidden_rnn

    # ---- Hoisted input projections (one big matmul each, off the recurrence)
    x = x_ref[...]                                                 # (T*Bp, F)
    xw_l = (jnp.dot(x, w_ih_l_ref[...], preferred_element_type=jnp.float32)
            + b_l_ref[...])                                        # (T*Bp, 4H)
    xw_r = (jnp.dot(x, w_ih_r_ref[...], preferred_element_type=jnp.float32)
            + b_r_ref[...])                                        # (T*Bp, Hr)

    # loop-invariant recurrent weights
    w_hh_l = w_hh_l_ref[...]                                       # (H, 4H)
    w_hh_r = w_hh_r_ref[...]                                       # (Hr, Hr)

    # ---- Hoisted lane-mask constants for the single full-width gate tanh:
    #   g lanes (2H:3H)   -> tanh(x)
    #   i/f/o lanes       -> sigmoid(x) = 0.5 * tanh(0.5 * x) + 0.5
    lane = lax.broadcasted_iota(jnp.int32, (Bp, 4 * H), 1)
    is_g = jnp.logical_and(lane >= 2 * H, lane < 3 * H)
    pre_scale = jnp.where(is_g, 1.0, 0.5).astype(jnp.float32)      # (Bp, 4H)
    post_mul = jnp.where(is_g, 1.0, 0.5).astype(jnp.float32)
    post_add = jnp.where(is_g, 0.0, 0.5).astype(jnp.float32)

    # initial states (zeros, as in the PyTorch forward)
    h = jnp.zeros((Bp, H), jnp.float32)
    c = jnp.zeros((Bp, H), jnp.float32)
    hr = jnp.zeros((Bp, Hr), jnp.float32)

    # ---- Fully-unrolled recurrence (T small & static). Only the unavoidable
    #      h @ W_hh matmuls + one full-width tanh remain on the serial chain;
    #      the independent RNN chain overlaps the LSTM MXU drain.
    # TODO(synk): optionally fuse the two per-step matmuls via a block-diagonal
    # (H+Hr, 4H+Hr) weight if a bundle dump shows the MXU pushes serialize.
    hs = []
    for t in range(T):
        lo = t * Bp
        # LSTM cell (PyTorch gate order: i, f, g, o)
        gates = xw_l[lo:lo + Bp, :] + jnp.dot(
            h, w_hh_l, preferred_element_type=jnp.float32)         # (Bp, 4H)
        t_all = jnp.tanh(gates * pre_scale)                        # 1 EUP push
        act = t_all * post_mul + post_add
        i = act[:, 0 * H:1 * H]
        f = act[:, 1 * H:2 * H]
        g = act[:, 2 * H:3 * H]
        o = act[:, 3 * H:4 * H]
        c = f * c + i * g
        h = o * jnp.tanh(c)
        hs.append(h)

        # vanilla RNN (tanh) cell — independent chain
        hr = jnp.tanh(xw_r[lo:lo + Bp, :] + jnp.dot(
            hr, w_hh_r, preferred_element_type=jnp.float32))       # (Bp, Hr)

    # ---- Folded head: fc_last(cat(fc_lstm(h_cat), fc_rnn(hr))) collapsed to
    #      two matmuls + one bias (folding done on static weights in wrapper).
    h_cat = jnp.concatenate(hs, axis=1)                            # (Bp, T*H)
    out = (jnp.dot(h_cat, w_head_l_ref[...],
                   preferred_element_type=jnp.float32)
           + jnp.dot(hr, w_head_r_ref[...],
                     preferred_element_type=jnp.float32)
           + b_head_ref[...])                                      # (Bp, Np)
    out_ref[...] = out.astype(out_ref.dtype)                       # full-tile vst


# ----------------------------------------------------------------------------
# Wrapper: weight folding / padding + pallas_call
# ----------------------------------------------------------------------------
def lstm_rnn_forward(x, params, *, hidden_lstm, hidden_rnn, n_outputs):
    B, T, F = x.shape
    H, Hr = hidden_lstm, hidden_rnn
    Bp = max(8, ((B + 7) // 8) * 8)              # pad batch to 8-sublane tile
    Np = max(128, ((n_outputs + 127) // 128) * 128)  # lane-dense output width

    # time-major, batch-padded, then flatten (T, Bp, F) -> (T*Bp, F) so every
    # per-timestep slice in the kernel is a full (8, lane) tile.
    x_tm = jnp.transpose(x, (1, 0, 2)).astype(jnp.float32)         # (T, B, F)
    x_tm = jnp.pad(x_tm, ((0, 0), (0, Bp - B), (0, 0)))            # (T, Bp, F)
    x_flat = x_tm.reshape(T * Bp, F)

    # ---- Constant-fold fc_last into fc_lstm / fc_rnn (static weights; done
    #      in full f32 precision once — free at runtime in a real deployment).
    hi = lax.Precision.HIGHEST
    w_last_t = params["w_fc_last"].T                               # (2n, n)
    w_top = w_last_t[:n_outputs, :]                                # (n, n)
    w_bot = w_last_t[n_outputs:, :]                                # (n, n)
    w_head_l = jnp.dot(params["w_fc_lstm"].T, w_top, precision=hi)  # (T*H, n)
    w_head_r = jnp.dot(params["w_fc_rnn"].T, w_bot, precision=hi)   # (Hr, n)
    b_head = (jnp.dot(params["b_fc_lstm"], w_top, precision=hi)
              + jnp.dot(params["b_fc_rnn"], w_bot, precision=hi)
              + params["b_fc_last"])                               # (n,)

    # lane-pad the folded head so the kernel's output store is a full tile
    w_head_l = jnp.pad(w_head_l, ((0, 0), (0, Np - n_outputs)))
    w_head_r = jnp.pad(w_head_r, ((0, 0), (0, Np - n_outputs)))
    b_head = jnp.pad(b_head, (0, Np - n_outputs))[None, :]

    args = (
        x_flat,
        params["w_ih_lstm"].T,                                     # (F, 4H)
        params["w_hh_lstm"].T,                                     # (H, 4H)
        (params["b_ih_lstm"] + params["b_hh_lstm"])[None, :],      # (1, 4H)
        params["w_ih_rnn"].T,                                      # (F, Hr)
        params["w_hh_rnn"].T,                                      # (Hr, Hr)
        (params["b_ih_rnn"] + params["b_hh_rnn"])[None, :],        # (1, Hr)
        w_head_l,                                                  # (T*H, Np)
        w_head_r,                                                  # (Hr, Np)
        b_head,                                                    # (1, Np)
    )

    kernel = functools.partial(
        lstm_rnn_kernel,
        seq_len=T,
        batch_padded=Bp,
        hidden_lstm=H,
        hidden_rnn=Hr,
    )

    vmem = pl.BlockSpec(memory_space=pltpu.MemorySpace.VMEM)
    out_pad = pl.pallas_call(
        kernel,
        out_shape=jax.ShapeDtypeStruct((Bp, Np), jnp.float32),
        in_specs=[vmem] * len(args),
        out_specs=vmem,
        compiler_params=pltpu.CompilerParams(
            vmem_limit_bytes=32 * 1024 * 1024),
    )(*args)
    return out_pad[:B, :n_outputs]


# ----------------------------------------------------------------------------
# Pure-JAX reference (unfused, exact module semantics) for correctness check
# ----------------------------------------------------------------------------
def reference_forward(x, params, *, hidden_lstm, hidden_rnn, n_outputs):
    B, T, F = x.shape
    H, Hr = hidden_lstm, hidden_rnn
    w_ih_l, w_hh_l = params["w_ih_lstm"], params["w_hh_lstm"]
    b_l = params["b_ih_lstm"] + params["b_hh_lstm"]
    w_ih_r, w_hh_r = params["w_ih_rnn"], params["w_hh_rnn"]
    b_r = params["b_ih_rnn"] + params["b_hh_rnn"]

    def lstm_step(carry, xt):
        h, c = carry
        gates = xt @ w_ih_l.T + h @ w_hh_l.T + b_l
        i = jax.nn.sigmoid(gates[:, 0 * H:1 * H])
        f = jax.nn.sigmoid(gates[:, 1 * H:2 * H])
        g = jnp.tanh(gates[:, 2 * H:3 * H])
        o = jax.nn.sigmoid(gates[:, 3 * H:4 * H])
        c = f * c + i * g
        h = o * jnp.tanh(c)
        return (h, c), h

    def rnn_step(h, xt):
        h = jnp.tanh(xt @ w_ih_r.T + h @ w_hh_r.T + b_r)
        return h, h

    x_tm = jnp.transpose(x, (1, 0, 2))
    _, hs = lax.scan(lstm_step, (jnp.zeros((B, H)), jnp.zeros((B, H))), x_tm)
    out_lstm_seq = jnp.transpose(hs, (1, 0, 2)).reshape(B, T * H)
    out_lstm = out_lstm_seq @ params["w_fc_lstm"].T + params["b_fc_lstm"]

    hr_last, _ = lax.scan(rnn_step, jnp.zeros((B, Hr)), x_tm)
    out_rnn = hr_last @ params["w_fc_rnn"].T + params["b_fc_rnn"]

    cat = jnp.concatenate([out_lstm, out_rnn], axis=1)
    return cat @ params["w_fc_last"].T + params["b_fc_last"]


# ----------------------------------------------------------------------------
# Deterministic parameter init (PyTorch-style uniform ranges)
# ----------------------------------------------------------------------------
def init_params(key, n_features, hidden_lstm, hidden_rnn, n_outputs, seq_len):
    def uni(k, shape, bound):
        return jax.random.uniform(k, shape, jnp.float32, -bound, bound)

    keys = jax.random.split(key, 16)
    s_l = 1.0 / jnp.sqrt(hidden_lstm)
    s_r = 1.0 / jnp.sqrt(hidden_rnn)
    s_fl = 1.0 / jnp.sqrt(hidden_lstm * seq_len)
    s_fr = 1.0 / jnp.sqrt(hidden_rnn)
    s_la = 1.0 / jnp.sqrt(2 * n_outputs)
    return {
        "w_ih_lstm": uni(keys[0], (4 * hidden_lstm, n_features), s_l),
        "w_hh_lstm": uni(keys[1], (4 * hidden_lstm, hidden_lstm), s_l),
        "b_ih_lstm": uni(keys[2], (4 * hidden_lstm,), s_l),
        "b_hh_lstm": uni(keys[3], (4 * hidden_lstm,), s_l),
        "w_fc_lstm": uni(keys[4], (n_outputs, hidden_lstm * seq_len), s_fl),
        "b_fc_lstm": uni(keys[5], (n_outputs,), s_fl),
        "w_ih_rnn": uni(keys[6], (hidden_rnn, n_features), s_r),
        "w_hh_rnn": uni(keys[7], (hidden_rnn, hidden_rnn), s_r),
        "b_ih_rnn": uni(keys[8], (hidden_rnn,), s_r),
        "b_hh_rnn": uni(keys[9], (hidden_rnn,), s_r),
        "w_fc_rnn": uni(keys[10], (n_outputs, hidden_rnn), s_fr),
        "b_fc_rnn": uni(keys[11], (n_outputs,), s_fr),
        "w_fc_last": uni(keys[12], (n_outputs, 2 * n_outputs), s_la),
        "b_fc_last": uni(keys[13], (n_outputs,), s_la),
    }


if __name__ == "__main__":
    # small shapes implied by the module: (batch, seq_len, n_features)
    B, T, F = 2, 8, 4
    H_LSTM, H_RNN, N_OUT = 32, 32, 4

    key = jax.random.PRNGKey(0)
    k_x, k_p = jax.random.split(key)
    x = jax.random.normal(k_x, (B, T, F), jnp.float32)
    params = init_params(k_p, F, H_LSTM, H_RNN, N_OUT, T)

    out = lstm_rnn_forward(
        x, params, hidden_lstm=H_LSTM, hidden_rnn=H_RNN, n_outputs=N_OUT
    )
    out = jax.block_until_ready(out)

    with jax.default_matmul_precision("highest"):
        ref = reference_forward(
            x, params, hidden_lstm=H_LSTM, hidden_rnn=H_RNN, n_outputs=N_OUT
        )
    assert out.shape == (B, N_OUT)
    assert jnp.allclose(out, ref, atol=2e-4, rtol=2e-4), "mismatch vs reference"

    print("KERNEL_OK")
</pallas_src>

<mosaic_0001>
module attributes {stable_mosaic.version = 11 : i64} {
  func.func @lstm_rnn_kernel(%arg0: memref<64x4xf32, #tpu.memory_space<vmem>>, %arg1: memref<4x128xf32, #tpu.memory_space<vmem>>, %arg2: memref<32x128xf32, #tpu.memory_space<vmem>>, %arg3: memref<1x128xf32, #tpu.memory_space<vmem>>, %arg4: memref<4x32xf32, #tpu.memory_space<vmem>>, %arg5: memref<32x32xf32, #tpu.memory_space<vmem>>, %arg6: memref<1x32xf32, #tpu.memory_space<vmem>>, %arg7: memref<256x128xf32, #tpu.memory_space<vmem>>, %arg8: memref<32x128xf32, #tpu.memory_space<vmem>>, %arg9: memref<1x128xf32, #tpu.memory_space<vmem>>, %arg10: memref<8x128xf32, #tpu.memory_space<vmem>>) attributes {dimension_semantics = [], scalar_prefetch = 0 : i64, scratch_operands = 0 : i64, tpu.core_type = #tpu.core_type<tc>} {
    %c0 = arith.constant 0 : index
    %c0_0 = arith.constant 0 : index
    %0 = vector.load %arg0[%c0, %c0_0] : memref<64x4xf32, #tpu.memory_space<vmem>>, vector<64x4xf32>
    %c0_1 = arith.constant 0 : index
    %c0_2 = arith.constant 0 : index
    %1 = vector.load %arg1[%c0_1, %c0_2] : memref<4x128xf32, #tpu.memory_space<vmem>>, vector<4x128xf32>
    %cst = arith.constant dense<0.000000e+00> : vector<64x128xf32>
    %2 = tpu.matmul %0, %1, %cst {dimension_numbers = #tpu.dot_dimension_numbers<[1], [0], [0], [1], [0, 0, 1, 1], [], []>} : vector<64x4xf32>, vector<4x128xf32>, vector<64x128xf32> -> vector<64x128xf32>
    %c0_3 = arith.constant 0 : index
    %c0_4 = arith.constant 0 : index
    %3 = vector.load %arg3[%c0_3, %c0_4] : memref<1x128xf32, #tpu.memory_space<vmem>>, vector<1x128xf32>
    %4 = vector.broadcast %3 : vector<1x128xf32> to vector<64x128xf32>
    %5 = arith.addf %2, %4 : vector<64x128xf32>
    %c0_5 = arith.constant 0 : index
    %c0_6 = arith.constant 0 : index
    %6 = vector.load %arg4[%c0_5, %c0_6] : memref<4x32xf32, #tpu.memory_space<vmem>>, vector<4x32xf32>
    %cst_7 = arith.constant dense<0.000000e+00> : vector<64x32xf32>
    %7 = tpu.matmul %0, %6, %cst_7 {dimension_numbers = #tpu.dot_dimension_numbers<[1], [0], [0], [1], [0, 0, 1, 1], [], []>} : vector<64x4xf32>, vector<4x32xf32>, vector<64x32xf32> -> vector<64x32xf32>
    %c0_8 = arith.constant 0 : index
    %c0_9 = arith.constant 0 : index
    %8 = vector.load %arg6[%c0_8, %c0_9] : memref<1x32xf32, #tpu.memory_space<vmem>>, vector<1x32xf32>
    %9 = vector.broadcast %8 : vector<1x32xf32> to vector<64x32xf32>
    %10 = arith.addf %7, %9 : vector<64x32xf32>
    %c0_10 = arith.constant 0 : index
    %c0_11 = arith.constant 0 : index
    %11 = vector.load %arg2[%c0_10, %c0_11] : memref<32x128xf32, #tpu.memory_space<vmem>>, vector<32x128xf32>
    %c0_12 = arith.constant 0 : index
    %c0_13 = arith.constant 0 : index
    %12 = vector.load %arg5[%c0_12, %c0_13] : memref<32x32xf32, #tpu.memory_space<vmem>>, vector<32x32xf32>
    %13 = tpu.iota {dimensions = array<i32: 1>} : vector<8x128xi32>
    %c64_i32 = arith.constant 64 : i32
    %14 = vector.broadcast %c64_i32 : i32 to vector<8x128xi32>
    %15 = arith.cmpi sge, %13, %14 : vector<8x128xi32>
    %c96_i32 = arith.constant 96 : i32
    %16 = vector.broadcast %c96_i32 : i32 to vector<8x128xi32>
    %17 = arith.cmpi slt, %13, %16 : vector<8x128xi32>
    %18 = arith.andi %15, %17 : vector<8x128xi1>
    %cst_14 = arith.constant 1.000000e+00 : f32
    %cst_15 = arith.constant 5.000000e-01 : f32
    %19 = vector.broadcast %cst_14 : f32 to vector<8x128xf32>
    %20 = vector.broadcast %cst_15 : f32 to vector<8x128xf32>
    %21 = arith.select %18, %19, %20 : vector<8x128xi1>, vector<8x128xf32>
    %cst_16 = arith.constant 1.000000e+00 : f32
    %cst_17 = arith.constant 5.000000e-01 : f32
    %22 = vector.broadcast %cst_16 : f32 to vector<8x128xf32>
    %23 = vector.broadcast %cst_17 : f32 to vector<8x128xf32>
    %24 = arith.select %18, %22, %23 : vector<8x128xi1>, vector<8x128xf32>
    %cst_18 = arith.constant 0.000000e+00 : f32
    %cst_19 = arith.constant 5.000000e-01 : f32
    %25 = vector.broadcast %cst_18 : f32 to vector<8x128xf32>
    %26 = vector.broadcast %cst_19 : f32 to vector<8x128xf32>
    %27 = arith.select %18, %25, %26 : vector<8x128xi1>, vector<8x128xf32>
    %cst_20 = arith.constant 0.000000e+00 : f32
    %28 = vector.broadcast %cst_20 : f32 to vector<8x32xf32>
    %cst_21 = arith.constant 0.000000e+00 : f32
    %29 = vector.broadcast %cst_21 : f32 to vector<8x32xf32>
    %cst_22 = arith.constant 0.000000e+00 : f32
    %30 = vector.broadcast %cst_22 : f32 to vector<8x32xf32>
    %31 = vector.extract_strided_slice %5 {offsets = [0, 0], sizes = [8, 128], strides = [1, 1]} : vector<64x128xf32> to vector<8x128xf32>
    %cst_23 = arith.constant dense<0.000000e+00> : vector<8x128xf32>
    %32 = tpu.matmul %28, %11, %cst_23 {dimension_numbers = #tpu.dot_dimension_numbers<[1], [0], [0], [1], [0, 0, 1, 1], [], []>} : vector<8x32xf32>, vector<32x128xf32>, vector<8x128xf32> -> vector<8x128xf32>
    %33 = arith.addf %31, %32 : vector<8x128xf32>
    %34 = arith.mulf %33, %21 : vector<8x128xf32>
    %35 = math.tanh %34 : vector<8x128xf32>
    %36 = arith.mulf %35, %24 : vector<8x128xf32>
    %37 = arith.addf %36, %27 : vector<8x128xf32>
    %38 = vector.extract_strided_slice %37 {offsets = [0, 0], sizes = [8, 32], strides = [1, 1]} : vector<8x128xf32> to vector<8x32xf32>
    %39 = vector.extract_strided_slice %37 {offsets = [0, 32], sizes = [8, 32], strides = [1, 1]} : vector<8x128xf32> to vector<8x32xf32>
    %40 = vector.extract_strided_slice %37 {offsets = [0, 64], sizes = [8, 32], strides = [1, 1]} : vector<8x128xf32> to vector<8x32xf32>
    %41 = vector.extract_strided_slice %37 {offsets = [0, 96], sizes = [8, 32], strides = [1, 1]} : vector<8x128xf32> to vector<8x32xf32>
    %42 = arith.mulf %39, %29 : vector<8x32xf32>
    %43 = arith.mulf %38, %40 : vector<8x32xf32>
    %44 = arith.addf %42, %43 : vector<8x32xf32>
    %45 = math.tanh %44 : vector<8x32xf32>
    %46 = arith.mulf %41, %45 : vector<8x32xf32>
    %47 = vector.extract_strided_slice %10 {offsets = [0, 0], sizes = [8, 32], strides = [1, 1]} : vector<64x32xf32> to vector<8x32xf32>
    %cst_24 = arith.constant dense<0.000000e+00> : vector<8x32xf32>
    %48 = tpu.matmul %30, %12, %cst_24 {dimension_numbers = #tpu.dot_dimension_numbers<[1], [0], [0], [1], [0, 0, 1, 1], [], []>} : vector<8x32xf32>, vector<32x32xf32>, vector<8x32xf32> -> vector<8x32xf32>
    %49 = arith.addf %47, %48 : vector<8x32xf32>
    %50 = math.tanh %49 : vector<8x32xf32>
    %51 = vector.extract_strided_slice %5 {offsets = [8, 0], sizes = [8, 128], strides = [1, 1]} : vector<64x128xf32> to vector<8x128xf32>
    %cst_25 = arith.constant dense<0.000000e+00> : vector<8x128xf32>
    %52 = tpu.matmul %46, %11, %cst_25 {dimension_numbers = #tpu.dot_dimension_numbers<[1], [0], [0], [1], [0, 0, 1, 1], [], []>} : vector<8x32xf32>, vector<32x128xf32>, vector<8x128xf32> -> vector<8x128xf32>
    %53 = arith.addf %51, %52 : vector<8x128xf32>
    %54 = arith.mulf %53, %21 : vector<8x128xf32>
    %55 = math.tanh %54 : vector<8x128xf32>
    %56 = arith.mulf %55, %24 : vector<8x128xf32>
    %57 = arith.addf %56, %27 : vector<8x128xf32>
    %58 = vector.extract_strided_slice %57 {offsets = [0, 0], sizes = [8, 32], strides = [1, 1]} : vector<8x128xf32> to vector<8x32xf32>
    %59 = vector.extract_strided_slice %57 {offsets = [0, 32], sizes = [8, 32], strides = [1, 1]} : vector<8x128xf32> to vector<8x32xf32>
    %60 = vector.extract_strided_slice %57 {offsets = [0, 64], sizes = [8, 32], strides = [1, 1]} : vector<8x128xf32> to vector<8x32xf32>
    %61 = vector.extract_strided_slice %57 {offsets = [0, 96], sizes = [8, 32], strides = [1, 1]} : vector<8x128xf32> to vector<8x32xf32>
    %62 = arith.mulf %59, %44 : vector<8x32xf32>
    %63 = arith.mulf %58, %60 : vector<8x32xf32>
    %64 = arith.addf %62, %63 : vector<8x32xf32>
    %65 = math.tanh %64 : vector<8x32xf32>
    %66 = arith.mulf %61, %65 : vector<8x32xf32>
    %67 = vector.extract_strided_slice %10 {offsets = [8, 0], sizes = [8, 32], strides = [1, 1]} : vector<64x32xf32> to vector<8x32xf32>
    %cst_26 = arith.constant dense<0.000000e+00> : vector<8x32xf32>
    %68 = tpu.matmul %50, %12, %cst_26 {dimension_numbers = #tpu.dot_dimension_numbers<[1], [0], [0], [1], [0, 0, 1, 1], [], []>} : vector<8x32xf32>, vector<32x32xf32>, vector<8x32xf32> -> vector<8x32xf32>
    %69 = arith.addf %67, %68 : vector<8x32xf32>
    %70 = math.tanh %69 : vector<8x32xf32>
    %71 = vector.extract_strided_slice %5 {offsets = [16, 0], sizes = [8, 128], strides = [1, 1]} : vector<64x128xf32> to vector<8x128xf32>
    %cst_27 = arith.constant dense<0.000000e+00> : vector<8x128xf32>
    %72 = tpu.matmul %66, %11, %cst_27 {dimension_numbers = #tpu.dot_dimension_numbers<[1], [0], [0], [1], [0, 0, 1, 1], [], []>} : vector<8x32xf32>, vector<32x128xf32>, vector<8x128xf32> -> vector<8x128xf32>
    %73 = arith.addf %71, %72 : vector<8x128xf32>
    %74 = arith.mulf %73, %21 : vector<8x128xf32>
    %75 = math.tanh %74 : vector<8x128xf32>
    %76 = arith.mulf %75, %24 : vector<8x128xf32>
    %77 = arith.addf %76, %27 : vector<8x128xf32>
    %78 = vector.extract_strided_slice %77 {offsets = [0, 0], sizes = [8, 32], strides = [1, 1]} : vector<8x128xf32> to vector<8x32xf32>
    %79 = vector.extract_strided_slice %77 {offsets = [0, 32], sizes = [8, 32], strides = [1, 1]} : vector<8x128xf32> to vector<8x32xf32>
    %80 = vector.extract_strided_slice %77 {offsets = [0, 64], sizes = [8, 32], strides = [1, 1]} : vector<8x128xf32> to vector<8x32xf32>
    %81 = vector.extract_strided_slice %77 {offsets = [0, 96], sizes = [8, 32], strides = [1, 1]} : vector<8x128xf32> to vector<8x32xf32>
    %82 = arith.mulf %79, %64 : vector<8x32xf32>
    %83 = arith.mulf %78, %80 : vector<8x32xf32>
    %84 = arith.addf %82, %83 : vector<8x32xf32>
    %85 = math.tanh %84 : vector<8x32xf32>
    %86 = arith.mulf %81, %85 : vector<8x32xf32>
    %87 = vector.extract_strided_slice %10 {offsets = [16, 0], sizes = [8, 32], strides = [1, 1]} : vector<64x32xf32> to vector<8x32xf32>
    %cst_28 = arith.constant dense<0.000000e+00> : vector<8x32xf32>
    %88 = tpu.matmul %70, %12, %cst_28 {dimension_numbers = #tpu.dot_dimension_numbers<[1], [0], [0], [1], [0, 0, 1, 1], [], []>} : vector<8x32xf32>, vector<32x32xf32>, vector<8x32xf32> -> vector<8x32xf32>
    %89 = arith.addf %87, %88 : vector<8x32xf32>
    %90 = math.tanh %89 : vector<8x32xf32>
    %91 = vector.extract_strided_slice %5 {offsets = [24, 0], sizes = [8, 128], strides = [1, 1]} : vector<64x128xf32> to vector<8x128xf32>
    %cst_29 = arith.constant dense<0.000000e+00> : vector<8x128xf32>
    %92 = tpu.matmul %86, %11, %cst_29 {dimension_numbers = #tpu.dot_dimension_numbers<[1], [0], [0], [1], [0, 0, 1, 1], [], []>} : vector<8x32xf32>, vector<32x128xf32>, vector<8x128xf32> -> vector<8x128xf32>
    %93 = arith.addf %91, %92 : vector<8x128xf32>
    %94 = arith.mulf %93, %21 : vector<8x128xf32>
    %95 = math.tanh %94 : vector<8x128xf32>
    %96 = arith.mulf %95, %24 : vector<8x128xf32>
    %97 = arith.addf %96, %27 : vector<8x128xf32>
    %98 = vector.extract_strided_slice %97 {offsets = [0, 0], sizes = [8, 32], strides = [1, 1]} : vector<8x128xf32> to vector<8x32xf32>
    %99 = vector.extract_strided_slice %97 {offsets = [0, 32], sizes = [8, 32], strides = [1, 1]} : vector<8x128xf32> to vector<8x32xf32>
    %100 = vector.extract_strided_slice %97 {offsets = [0, 64], sizes = [8, 32], strides = [1, 1]} : vector<8x128xf32> to vector<8x32xf32>
    %101 = vector.extract_strided_slice %97 {offsets = [0, 96], sizes = [8, 32], strides = [1, 1]} : vector<8x128xf32> to vector<8x32xf32>
    %102 = arith.mulf %99, %84 : vector<8x32xf32>
    %103 = arith.mulf %98, %100 : vector<8x32xf32>
    %104 = arith.addf %102, %103 : vector<8x32xf32>
    %105 = math.tanh %104 : vector<8x32xf32>
    %106 = arith.mulf %101, %105 : vector<8x32xf32>
    %107 = vector.extract_strided_slice %10 {offsets = [24, 0], sizes = [8, 32], strides = [1, 1]} : vector<64x32xf32> to vector<8x32xf32>
    %cst_30 = arith.constant dense<0.000000e+00> : vector<8x32xf32>
    %108 = tpu.matmul %90, %12, %cst_30 {dimension_numbers = #tpu.dot_dimension_numbers<[1], [0], [0], [1], [0, 0, 1, 1], [], []>} : vector<8x32xf32>, vector<32x32xf32>, vector<8x32xf32> -> vector<8x32xf32>
    %109 = arith.addf %107, %108 : vector<8x32xf32>
    %110 = math.tanh %109 : vector<8x32xf32>
    %111 = vector.extract_strided_slice %5 {offsets = [32, 0], sizes = [8, 128], strides = [1, 1]} : vector<64x128xf32> to vector<8x128xf32>
    %cst_31 = arith.constant dense<0.000000e+00> : vector<8x128xf32>
    %112 = tpu.matmul %106, %11, %cst_31 {dimension_numbers = #tpu.dot_dimension_numbers<[1], [0], [0], [1], [0, 0, 1, 1], [], []>} : vector<8x32xf32>, vector<32x128xf32>, vector<8x128xf32> -> vector<8x128xf32>
    %113 = arith.addf %111, %112 : vector<8x128xf32>
    %114 = arith.mulf %113, %21 : vector<8x128xf32>
    %115 = math.tanh %114 : vector<8x128xf32>
    %116 = arith.mulf %115, %24 : vector<8x128xf32>
    %117 = arith.addf %116, %27 : vector<8x128xf32>
    %118 = vector.extract_strided_slice %117 {offsets = [0, 0], sizes = [8, 32], strides = [1, 1]} : vector<8x128xf32> to vector<8x32xf32>
    %119 = vector.extract_strided_slice %117 {offsets = [0, 32], sizes = [8, 32], strides = [1, 1]} : vector<8x128xf32> to vector<8x32xf32>
    %120 = vector.extract_strided_slice %117 {offsets = [0, 64], sizes = [8, 32], strides = [1, 1]} : vector<8x128xf32> to vector<8x32xf32>
    %121 = vector.extract_strided_slice %117 {offsets = [0, 96], sizes = [8, 32], strides = [1, 1]} : vector<8x128xf32> to vector<8x32xf32>
    %122 = arith.mulf %119, %104 : vector<8x32xf32>
    %123 = arith.mulf %118, %120 : vector<8x32xf32>
    %124 = arith.addf %122, %123 : vector<8x32xf32>
    %125 = math.tanh %124 : vector<8x32xf32>
    %126 = arith.mulf %121, %125 : vector<8x32xf32>
    %127 = vector.extract_strided_slice %10 {offsets = [32, 0], sizes = [8, 32], strides = [1, 1]} : vector<64x32xf32> to vector<8x32xf32>
    %cst_32 = arith.constant dense<0.000000e+00> : vector<8x32xf32>
    %128 = tpu.matmul %110, %12, %cst_32 {dimension_numbers = #tpu.dot_dimension_numbers<[1], [0], [0], [1], [0, 0, 1, 1], [], []>} : vector<8x32xf32>, vector<32x32xf32>, vector<8x32xf32> -> vector<8x32xf32>
    %129 = arith.addf %127, %128 : vector<8x32xf32>
    %130 = math.tanh %129 : vector<8x32xf32>
    %131 = vector.extract_strided_slice %5 {offsets = [40, 0], sizes = [8, 128], strides = [1, 1]} : vector<64x128xf32> to vector<8x128xf32>
    %cst_33 = arith.constant dense<0.000000e+00> : vector<8x128xf32>
    %132 = tpu.matmul %126, %11, %cst_33 {dimension_numbers = #tpu.dot_dimension_numbers<[1], [0], [0], [1], [0, 0, 1, 1], [], []>} : vector<8x32xf32>, vector<32x128xf32>, vector<8x128xf32> -> vector<8x128xf32>
    %133 = arith.addf %131, %132 : vector<8x128xf32>
    %134 = arith.mulf %133, %21 : vector<8x128xf32>
    %135 = math.tanh %134 : vector<8x128xf32>
    %136 = arith.mulf %135, %24 : vector<8x128xf32>
    %137 = arith.addf %136, %27 : vector<8x128xf32>
    %138 = vector.extract_strided_slice %137 {offsets = [0, 0], sizes = [8, 32], strides = [1, 1]} : vector<8x128xf32> to vector<8x32xf32>
    %139 = vector.extract_strided_slice %137 {offsets = [0, 32], sizes = [8, 32], strides = [1, 1]} : vector<8x128xf32> to vector<8x32xf32>
    %140 = vector.extract_strided_slice %137 {offsets = [0, 64], sizes = [8, 32], strides = [1, 1]} : vector<8x128xf32> to vector<8x32xf32>
    %141 = vector.extract_strided_slice %137 {offsets = [0, 96], sizes = [8, 32], strides = [1, 1]} : vector<8x128xf32> to vector<8x32xf32>
    %142 = arith.mulf %139, %124 : vector<8x32xf32>
    %143 = arith.mulf %138, %140 : vector<8x32xf32>
    %144 = arith.addf %142, %143 : vector<8x32xf32>
    %145 = math.tanh %144 : vector<8x32xf32>
    %146 = arith.mulf %141, %145 : vector<8x32xf32>
    %147 = vector.extract_strided_slice %10 {offsets = [40, 0], sizes = [8, 32], strides = [1, 1]} : vector<64x32xf32> to vector<8x32xf32>
    %cst_34 = arith.constant dense<0.000000e+00> : vector<8x32xf32>
    %148 = tpu.matmul %130, %12, %cst_34 {dimension_numbers = #tpu.dot_dimension_numbers<[1], [0], [0], [1], [0, 0, 1, 1], [], []>} : vector<8x32xf32>, vector<32x32xf32>, vector<8x32xf32> -> vector<8x32xf32>
    %149 = arith.addf %147, %148 : vector<8x32xf32>
    %150 = math.tanh %149 : vector<8x32xf32>
    %151 = vector.extract_strided_slice %5 {offsets = [48, 0], sizes = [8, 128], strides = [1, 1]} : vector<64x128xf32> to vector<8x128xf32>
    %cst_35 = arith.constant dense<0.000000e+00> : vector<8x128xf32>
    %152 = tpu.matmul %146, %11, %cst_35 {dimension_numbers = #tpu.dot_dimension_numbers<[1], [0], [0], [1], [0, 0, 1, 1], [], []>} : vector<8x32xf32>, vector<32x128xf32>, vector<8x128xf32> -> vector<8x128xf32>
    %153 = arith.addf %151, %152 : vector<8x128xf32>
    %154 = arith.mulf %153, %21 : vector<8x128xf32>
    %155 = math.tanh %154 : vector<8x128xf32>
    %156 = arith.mulf %155, %24 : vector<8x128xf32>
    %157 = arith.addf %156, %27 : vector<8x128xf32>
    %158 = vector.extract_strided_slice %157 {offsets = [0, 0], sizes = [8, 32], strides = [1, 1]} : vector<8x128xf32> to vector<8x32xf32>
    %159 = vector.extract_strided_slice %157 {offsets = [0, 32], sizes = [8, 32], strides = [1, 1]} : vector<8x128xf32> to vector<8x32xf32>
    %160 = vector.extract_strided_slice %157 {offsets = [0, 64], sizes = [8, 32], strides = [1, 1]} : vector<8x128xf32> to vector<8x32xf32>
    %161 = vector.extract_strided_slice %157 {offsets = [0, 96], sizes = [8, 32], strides = [1, 1]} : vector<8x128xf32> to vector<8x32xf32>
    %162 = arith.mulf %159, %144 : vector<8x32xf32>
    %163 = arith.mulf %158, %160 : vector<8x32xf32>
    %164 = arith.addf %162, %163 : vector<8x32xf32>
    %165 = math.tanh %164 : vector<8x32xf32>
    %166 = arith.mulf %161, %165 : vector<8x32xf32>
    %167 = vector.extract_strided_slice %10 {offsets = [48, 0], sizes = [8, 32], strides = [1, 1]} : vector<64x32xf32> to vector<8x32xf32>
    %cst_36 = arith.constant dense<0.000000e+00> : vector<8x32xf32>
    %168 = tpu.matmul %150, %12, %cst_36 {dimension_numbers = #tpu.dot_dimension_numbers<[1], [0], [0], [1], [0, 0, 1, 1], [], []>} : vector<8x32xf32>, vector<32x32xf32>, vector<8x32xf32> -> vector<8x32xf32>
    %169 = arith.addf %167, %168 : vector<8x32xf32>
    %170 = math.tanh %169 : vector<8x32xf32>
    %171 = vector.extract_strided_slice %5 {offsets = [56, 0], sizes = [8, 128], strides = [1, 1]} : vector<64x128xf32> to vector<8x128xf32>
    %cst_37 = arith.constant dense<0.000000e+00> : vector<8x128xf32>
    %172 = tpu.matmul %166, %11, %cst_37 {dimension_numbers = #tpu.dot_dimension_numbers<[1], [0], [0], [1], [0, 0, 1, 1], [], []>} : vector<8x32xf32>, vector<32x128xf32>, vector<8x128xf32> -> vector<8x128xf32>
    %173 = arith.addf %171, %172 : vector<8x128xf32>
    %174 = arith.mulf %173, %21 : vector<8x128xf32>
    %175 = math.tanh %174 : vector<8x128xf32>
    %176 = arith.mulf %175, %24 : vector<8x128xf32>
    %177 = arith.addf %176, %27 : vector<8x128xf32>
    %178 = vector.extract_strided_slice %177 {offsets = [0, 0], sizes = [8, 32], strides = [1, 1]} : vector<8x128xf32> to vector<8x32xf32>
    %179 = vector.extract_strided_slice %177 {offsets = [0, 32], sizes = [8, 32], strides = [1, 1]} : vector<8x128xf32> to vector<8x32xf32>
    %180 = vector.extract_strided_slice %177 {offsets = [0, 64], sizes = [8, 32], strides = [1, 1]} : vector<8x128xf32> to vector<8x32xf32>
    %181 = vector.extract_strided_slice %177 {offsets = [0, 96], sizes = [8, 32], strides = [1, 1]} : vector<8x128xf32> to vector<8x32xf32>
    %182 = arith.mulf %179, %164 : vector<8x32xf32>
    %183 = arith.mulf %178, %180 : vector<8x32xf32>
    %184 = arith.addf %182, %183 : vector<8x32xf32>
    %185 = math.tanh %184 : vector<8x32xf32>
    %186 = arith.mulf %181, %185 : vector<8x32xf32>
    %187 = vector.extract_strided_slice %10 {offsets = [56, 0], sizes = [8, 32], strides = [1, 1]} : vector<64x32xf32> to vector<8x32xf32>
    %cst_38 = arith.constant dense<0.000000e+00> : vector<8x32xf32>
    %188 = tpu.matmul %170, %12, %cst_38 {dimension_numbers = #tpu.dot_dimension_numbers<[1], [0], [0], [1], [0, 0, 1, 1], [], []>} : vector<8x32xf32>, vector<32x32xf32>, vector<8x32xf32> -> vector<8x32xf32>
    %189 = arith.addf %187, %188 : vector<8x32xf32>
    %190 = math.tanh %189 : vector<8x32xf32>
    %191 = tpu.concatenate %46, %66, %86, %106, %126, %146, %166, %186 in 1 : vector<8x32xf32>, vector<8x32xf32>, vector<8x32xf32>, vector<8x32xf32>, vector<8x32xf32>, vector<8x32xf32>, vector<8x32xf32>, vector<8x32xf32> -> vector<8x256xf32>
    %c0_39 = arith.constant 0 : index
    %c0_40 = arith.constant 0 : index
    %192 = vector.load %arg7[%c0_39, %c0_40] : memref<256x128xf32, #tpu.memory_space<vmem>>, vector<256x128xf32>
    %cst_41 = arith.constant dense<0.000000e+00> : vector<8x128xf32>
    %193 = tpu.matmul %191, %192, %cst_41 {dimension_numbers = #tpu.dot_dimension_numbers<[1], [0], [0], [1], [0, 0, 1, 1], [], []>} : vector<8x256xf32>, vector<256x128xf32>, vector<8x128xf32> -> vector<8x128xf32>
    %c0_42 = arith.constant 0 : index
    %c0_43 = arith.constant 0 : index
    %194 = vector.load %arg8[%c0_42, %c0_43] : memref<32x128xf32, #tpu.memory_space<vmem>>, vector<32x128xf32>
    %cst_44 = arith.constant dense<0.000000e+00> : vector<8x128xf32>
    %195 = tpu.matmul %190, %194, %cst_44 {dimension_numbers = #tpu.dot_dimension_numbers<[1], [0], [0], [1], [0, 0, 1, 1], [], []>} : vector<8x32xf32>, vector<32x128xf32>, vector<8x128xf32> -> vector<8x128xf32>
    %196 = arith.addf %193, %195 : vector<8x128xf32>
    %c0_45 = arith.constant 0 : index
    %c0_46 = arith.constant 0 : index
    %197 = vector.load %arg9[%c0_45, %c0_46] : memref<1x128xf32, #tpu.memory_space<vmem>>, vector<1x128xf32>
    %198 = vector.broadcast %197 : vector<1x128xf32> to vector<8x128xf32>
    %199 = arith.addf %196, %198 : vector<8x128xf32>
    %c0_47 = arith.constant 0 : index
    %c0_48 = arith.constant 0 : index
    %200 = vector.load %arg10[%c0_47, %c0_48] : memref<8x128xf32, #tpu.memory_space<vmem>>, vector<8x128xf32>
    tpu.vector_store %arg10[%c0_47, %c0_48], %199 {strides = array<i32>} : memref<8x128xf32, #tpu.memory_space<vmem>>, vector<8x128xf32>,
    return
  }
}

</mosaic_0001>

<llo_original>
// kernel: tpu_custom_call.1
$region0: #{tpu_custom_call.1}
  #allocation0 [shape = 'u32[]', space=smem, size = 0x4, offset = 0x4, fixed_abs, tag = 'smem constant byte address 0x4 - core index']
  #allocation1 [shape = 'u32[72,128]{1,0:T(1,128)}', space=vmem, size = 0x9000, scoped, tag = 'internal scratch']
  %s0 = inlined_call_operand.vmem [shape: f32[64,4], index: 0, kind: input, shape index: {}]
  %s1 = inlined_call_operand.vmem [shape: f32[4,128], index: 1, kind: input, shape index: {}]
  %s2 = inlined_call_operand.vmem [shape: f32[32,128], index: 2, kind: input, shape index: {}]
  %s3 = inlined_call_operand.vmem [shape: f32[1,128], index: 3, kind: input, shape index: {}]
  %s4 = inlined_call_operand.hbm [shape: f32[4,32], index: 4, kind: input, shape index: {}]
  %s5 = inlined_call_operand.vmem [shape: f32[32,32], index: 5, kind: input, shape index: {}]
  %s6 = inlined_call_operand.vmem [shape: f32[1,32], index: 6, kind: input, shape index: {}]
  %s7 = inlined_call_operand.hbm [shape: f32[256,128], index: 7, kind: input, shape index: {}]
  %s8 = inlined_call_operand.hbm [shape: f32[32,128], index: 8, kind: input, shape index: {}]
  %s9 = inlined_call_operand.vmem [shape: f32[1,128], index: 9, kind: input, shape index: {}]
  %s10 = inlined_call_operand.hbm [shape: f32[8,128], index: 10, kind: output, shape index: {}]
  %s11 = sld [smem:[#allocation0]]
  $region62: #{tpu_custom_call.1} parent=0
    _
  %s13 = ssub.s32 1, %s11
  %s14 = scalar_select 0, %s13, %s11
  $region1: #{tpu_custom_call.1} parent=0
    #allocation2 [shape = 'u8[2048]{0}', space=vmem, size = 0x800, scoped, tag = 'input window, operand 4, single buffered']
    #allocation3 [shape = 's32[1]{0}', space=sflag, size = 0x4, scoped, tag = 'scoped memory for tpu_custom_call.1']
    #allocation4 [shape = 's32[1]{0}', space=sflag, size = 0x4, scoped, tag = 'scoped memory for tpu_custom_call.1']
    #allocation5 [shape = 'u8[131072]{0}', space=vmem, size = 0x20000, scoped, tag = 'input window, operand 7, single buffered']
    #allocation6 [shape = 's32[1]{0}', space=sflag, size = 0x4, scoped, tag = 'scoped memory for tpu_custom_call.1']
    #allocation7 [shape = 'u8[16384]{0}', space=vmem, size = 0x4000, scoped, tag = 'input window, operand 8, single buffered']
    #allocation8 [shape = 'u8[4096]{0}', space=vmem, size = 0x1000, scoped, tag = 'output window, operand 0, single buffered']
    %15 = vsyncpa [#allocation3], 0
    %16 = vsyncpa [#allocation6], 0
    %17 = vsyncpa [#allocation4], 0
    // Predicated region
    $region2: #{tpu_custom_call.1} parent=1 // pred_check
      _
    $region3: #{tpu_custom_call.1} parent=1 // pred_check_branch
      %19 = sbr.rel (0) target = $region5
    $region4: #{tpu_custom_call.1} parent=1 // pred_region
      _
    $region5: #{tpu_custom_call.1} parent=1 // pred_fallthru
      _
    // Predicated region
    $region6: #{tpu_custom_call.1} parent=1 // pred_check
      _
    $region7: #{tpu_custom_call.1} parent=1 // pred_check_branch
      %21 = sbr.rel (0) target = $region9
    $region8: #{tpu_custom_call.1} parent=1 // pred_region
      _
    $region9: #{tpu_custom_call.1} parent=1 // pred_fallthru
      _
    // Predicated region
    $region10: #{tpu_custom_call.1} parent=1 // pred_check
      _
    $region11: #{tpu_custom_call.1} parent=1 // pred_check_branch
      %23 = sbr.rel (0) target = $region13
    $region12: #{tpu_custom_call.1} parent=1 // pred_region
      _
    $region13: #{tpu_custom_call.1} parent=1 // pred_fallthru
      _
    // Predicated region
    $region14: #{tpu_custom_call.1} parent=1 // pred_check
      _
    $region15: #{tpu_custom_call.1} parent=1 // pred_check_branch
      %25 = sbr.rel (0) target = $region17
    $region16: #{tpu_custom_call.1} parent=1 // pred_region
      _
    $region17: #{tpu_custom_call.1} parent=1 // pred_fallthru
      _
    // Predicated region
    $region18: #{tpu_custom_call.1} parent=1 // pred_check
      _
    $region19: #{tpu_custom_call.1} parent=1 // pred_check_branch
      %27 = sbr.rel (0) target = $region21
    $region20: #{tpu_custom_call.1} parent=1 // pred_region
      %29 = vsyncadd [#allocation3], 0
      %s31 = sshll.u32 %s4, 4
      %s32 = int_to_ptr.hbm [resolvable:$true] %s31
      %s33 = sshll.u32 [#allocation2], 4
      %s34 = int_to_ptr.vmem [resolvable:$true] %s33
      %36 = dma.hbm_to_vmem [thread:$0]  %s32, 64, %s34, [#allocation3]
    $region21: #{tpu_custom_call.1} parent=1 // pred_fallthru
      _
    // Predicated region
    $region22: #{tpu_custom_call.1} parent=1 // pred_check
      _
    $region23: #{tpu_custom_call.1} parent=1 // pred_check_branch
      %38 = sbr.rel (0) target = $region25
    $region24: #{tpu_custom_call.1} parent=1 // pred_region
      _
    $region25: #{tpu_custom_call.1} parent=1 // pred_fallthru
      _
    // Predicated region
    $region26: #{tpu_custom_call.1} parent=1 // pred_check
      _
    $region27: #{tpu_custom_call.1} parent=1 // pred_check_branch
      %40 = sbr.rel (0) target = $region29
    $region28: #{tpu_custom_call.1} parent=1 // pred_region
      _
    $region29: #{tpu_custom_call.1} parent=1 // pred_fallthru
      _
    // Predicated region
    $region30: #{tpu_custom_call.1} parent=1 // pred_check
      _
    $region31: #{tpu_custom_call.1} parent=1 // pred_check_branch
      %42 = sbr.rel (0) target = $region33
    $region32: #{tpu_custom_call.1} parent=1 // pred_region
      %44 = vsyncadd [#allocation6], 0
      %s45 = sshll.u32 %s7, 4
      %s46 = int_to_ptr.hbm [resolvable:$true] %s45
      %s47 = sshll.u32 [#allocation5], 4
      %s48 = int_to_ptr.vmem [resolvable:$true] %s47
      %53 = dma.hbm_to_vmem [thread:$0]  %s46, 4096, %s48, [#allocation6], 128, 128, 8
    $region33: #{tpu_custom_call.1} parent=1 // pred_fallthru
      _
    // Predicated region
    $region34: #{tpu_custom_call.1} parent=1 // pred_check
      _
    $region35: #{tpu_custom_call.1} parent=1 // pred_check_branch
      %55 = sbr.rel (0) target = $region37
    $region36: #{tpu_custom_call.1} parent=1 // pred_region
      %57 = vsyncadd [#allocation6], 0
      %s58 = sshll.u32 %s8, 4
      %s59 = int_to_ptr.hbm [resolvable:$true] %s58
      %s60 = sshll.u32 [#allocation7], 4
      %s61 = int_to_ptr.vmem [resolvable:$true] %s60
      %66 = dma.hbm_to_vmem [thread:$0]  %s59, 512, %s61, [#allocation6], 128, 128, 8
    $region37: #{tpu_custom_call.1} parent=1 // pred_fallthru
      _
    // Predicated region
    $region38: #{tpu_custom_call.1} parent=1 // pred_check
      _
    $region39: #{tpu_custom_call.1} parent=1 // pred_check_branch
      %68 = sbr.rel (0) target = $region41
    $region40: #{tpu_custom_call.1} parent=1 // pred_region
      _
    $region41: #{tpu_custom_call.1} parent=1 // pred_fallthru
      _
    // Predicated region
    $region42: #{tpu_custom_call.1} parent=1 // pred_check
      _
    $region43: #{tpu_custom_call.1} parent=1 // pred_check_branch
      %70 = sbr.rel (0) target = $region45
    $region44: #{tpu_custom_call.1} parent=1 // pred_region
      %72 = dma.done [#allocation3], 64
    $region45: #{tpu_custom_call.1} parent=1 // pred_fallthru
      _
    // Predicated region
    $region46: #{tpu_custom_call.1} parent=1 // pred_check
      _
    $region47: #{tpu_custom_call.1} parent=1 // pred_check_branch
      %74 = sbr.rel (0) target = $region49
    $region48: #{tpu_custom_call.1} parent=1 // pred_region
      %76 = dma.done [#allocation6], 4096
    $region49: #{tpu_custom_call.1} parent=1 // pred_fallthru
      _
    // Predicated region
    $region50: #{tpu_custom_call.1} parent=1 // pred_check
      _
    $region51: #{tpu_custom_call.1} parent=1 // pred_check_branch
      %78 = sbr.rel (0) target = $region53
    $region52: #{tpu_custom_call.1} parent=1 // pred_region
      %80 = dma.done [#allocation6], 512
    $region53: #{tpu_custom_call.1} parent=1 // pred_fallthru
      _
    %v81 = vld [vmem:[%s0] sm:$0xff]
    %v82 = vld [vmem:[%s0 + $0x8] sm:$0xff]
    %v83 = vld [vmem:[%s0 + $0x10] sm:$0xff]
    %v84 = vld [vmem:[%s0 + $0x18] sm:$0xff]
    %v85 = vld [vmem:[%s0 + $0x20] sm:$0xff]
    %v86 = vld [vmem:[%s0 + $0x28] sm:$0xff]
    %v87 = vld [vmem:[%s0 + $0x30] sm:$0xff]
    %v88 = vld [vmem:[%s0 + $0x38] sm:$0xff]
    %v89 = vld [vmem:[%s1] sm:$0xf]
    %v90 = vld [vmem:[%s3] sm:$0x1]
    %v92 = vperm.slane %v90, 0
    %vm94 = vcmask 31744
    %v96 = vsel %vm94, %v81, 0
    %v99 = vsel %vm94, %v82, 0
    %v102 = vsel %vm94, %v83, 0
    %v105 = vsel %vm94, %v84, 0
    %v108 = vsel %vm94, %v85, 0
    %v111 = vsel %vm94, %v86, 0
    %v114 = vsel %vm94, %v87, 0
    %v117 = vsel %vm94, %v88, 0
    %vm119 = vcmask 1043456
    %v121 = vsel %vm119, %v89, 0
    %123 = vmatpush.msra.mxu0 0.0
    %124 = vmatpush.msra.mxu0 0.0
    %125 = vmatpush.msra.mxu0 0.0
    %126 = vmatpush.msra.mxu0 0.0
    %127 = vmatpush.msra.mxu0 0.0
    %128 = vmatpush.msra.mxu0 0.0
    %129 = vmatpush.msra.mxu0 0.0
    %130 = vmatpush.msra.mxu0 0.0
    %131 = vmatpush.msra.mxu0 0.0
    %132 = vmatpush.msra.mxu0 0.0
    %133 = vmatpush.msra.mxu0 0.0
    %134 = vmatpush.msra.mxu0 0.0
    %135 = vmatpush.msra.mxu0 0.0
    %136 = vmatpush.msra.mxu0 0.0
    %137 = vmatpush.msra.mxu0 0.0
    %138 = vmatpush.msra.mxu0 %v121
    %139 = vmatmul.f32.gmra.mxu0 %v96
    %v140 = vpop.f32.mrf.mxu0
    %v141 = vadd.f32 %v92, %v140
    %142 = vmatmul.f32.gmra.mxu0 %v99
    %v143 = vpop.f32.mrf.mxu0
    %v144 = vadd.f32 %v92, %v143
    %145 = vmatmul.f32.gmra.mxu0 %v102
    %v146 = vpop.f32.mrf.mxu0
    %v147 = vadd.f32 %v92, %v146
    %148 = vmatmul.f32.gmra.mxu0 %v105
    %v149 = vpop.f32.mrf.mxu0
    %v150 = vadd.f32 %v92, %v149
    %151 = vmatmul.f32.gmra.mxu0 %v108
    %v152 = vpop.f32.mrf.mxu0
    %v153 = vadd.f32 %v92, %v152
    %154 = vmatmul.f32.gmra.mxu0 %v111
    %v155 = vpop.f32.mrf.mxu0
    %v156 = vadd.f32 %v92, %v155
    %157 = vmatmul.f32.gmra.mxu0 %v114
    %v158 = vpop.f32.mrf.mxu0
    %v159 = vadd.f32 %v92, %v158
    %160 = vmatmul.f32.gmra.mxu0 %v117
    %v161 = vpop.f32.mrf.mxu0
    %v162 = vadd.f32 %v92, %v161
    %163 = vdwg.mxu0
    %v164 = vld [vmem:[#allocation2] sm:$0xf]
    %v165 = vld [vmem:[%s6] sm:$0x1]
    %v167 = vperm.slane %v165, 0
    %v170 = vsel %vm119, %v164, 0
    %172 = vmatpush.msra.mxu0 0.0
    %173 = vmatpush.msra.mxu0 0.0
    %174 = vmatpush.msra.mxu0 0.0
    %175 = vmatpush.msra.mxu0 0.0
    %176 = vmatpush.msra.mxu0 0.0
    %177 = vmatpush.msra.mxu0 0.0
    %178 = vmatpush.msra.mxu0 0.0
    %179 = vmatpush.msra.mxu0 0.0
    %180 = vmatpush.msra.mxu0 0.0
    %181 = vmatpush.msra.mxu0 0.0
    %182 = vmatpush.msra.mxu0 0.0
    %183 = vmatpush.msra.mxu0 0.0
    %184 = vmatpush.msra.mxu0 0.0
    %185 = vmatpush.msra.mxu0 0.0
    %186 = vmatpush.msra.mxu0 0.0
    %187 = vmatpush.msra.mxu0 %v170
    %188 = vmatmul.f32.gmra.mxu0 %v96
    %v189 = vpop.f32.mrf.mxu0
    %v190 = vadd.f32 %v167, %v189
    %191 = vmatmul.f32.gmra.mxu0 %v99
    %v192 = vpop.f32.mrf.mxu0
    %v193 = vadd.f32 %v167, %v192
    %194 = vmatmul.f32.gmra.mxu0 %v102
    %v195 = vpop.f32.mrf.mxu0
    %v196 = vadd.f32 %v167, %v195
    %197 = vmatmul.f32.gmra.mxu0 %v105
    %v198 = vpop.f32.mrf.mxu0
    %v199 = vadd.f32 %v167, %v198
    %200 = vmatmul.f32.gmra.mxu0 %v108
    %v201 = vpop.f32.mrf.mxu0
    %v202 = vadd.f32 %v167, %v201
    %203 = vmatmul.f32.gmra.mxu0 %v111
    %v204 = vpop.f32.mrf.mxu0
    %v205 = vadd.f32 %v167, %v204
    %206 = vmatmul.f32.gmra.mxu0 %v114
    %v207 = vpop.f32.mrf.mxu0
    %v208 = vadd.f32 %v167, %v207
    %209 = vmatmul.f32.gmra.mxu0 %v117
    %v210 = vpop.f32.mrf.mxu0
    %v211 = vadd.f32 %v167, %v210
    %212 = vdwg.mxu0
    %v213 = vld [vmem:[%s2] sm:$0xff]
    %v214 = vld [vmem:[%s2 + $0x8] sm:$0xff]
    %v215 = vld [vmem:[%s2 + $0x10] sm:$0xff]
    %v216 = vld [vmem:[%s2 + $0x18] sm:$0xff]
    %v217 = vld [vmem:[%s5] sm:$0xff]
    %v218 = vld [vmem:[%s5 + $0x8] sm:$0xff]
    %v219 = vld [vmem:[%s5 + $0x10] sm:$0xff]
    %v220 = vld [vmem:[%s5 + $0x18] sm:$0xff]
    %v221 = vlaneseq
    %v222 = vand.u32 %v221, 127
    %vm223 = vcmp.ge.s32.totalorder %v222, 64
    %vm224 = vcmp.lt.s32.totalorder %v222, 96
    %vm225 = vmand %vm223, %vm224
    %v226 = vsel %vm225, 1.0, 0.5
    %v227 = vsel %vm225, 0.0, 0.5
    %vm228 = vcmask 261120
    %v230 = vsel %vm228, 0.0, 0
    %232 = vmatpush.msra.mxu0 0.0
    %233 = vmatpush.msra.mxu0 0.0
    %234 = vmatpush.msra.mxu0 0.0
    %235 = vmatpush.msra.mxu0 0.0
    %236 = vmatpush.msra.mxu0 0.0
    %237 = vmatpush.msra.mxu0 0.0
    %238 = vmatpush.msra.mxu0 0.0
    %239 = vmatpush.msra.mxu0 0.0
    %240 = vmatpush.msra.mxu0 0.0
    %241 = vmatpush.msra.mxu0 0.0
    %242 = vmatpush.msra.mxu0 0.0
    %243 = vmatpush.msra.mxu0 0.0
    %244 = vmatpush.msra.mxu0 %v216
    %245 = vmatpush.msra.mxu0 %v215
    %246 = vmatpush.msra.mxu0 %v214
    %247 = vmatpush.msra.mxu0 %v213
    %248 = vmatmul.f32.gmra.mxu0 %v230
    %v249 = vpop.f32.mrf.mxu0
    %v250 = vadd.f32 0.0, %v249
    %251 = vdwg.mxu0
    %v252 = vadd.f32 %v141, %v250
    %v253 = vmul.f32 %v252, %v226
    %v254 = vtanh.pop %v253
    %v255 = vmul.f32 %v254, %v226
    %v256 = vadd.f32 %v255, %v227
    %v257 = vmul.f32 %v256, 0.0
    %259 = vrot.lane.b32.xlu0 %v256, 64
    %v260 = vpop.permute.xlu0 %259
    %v262 = vmul.f32 %v256, %v260
    %264 = vrot.lane.b32.xlu0 %v262, 32
    %v265 = vpop.permute.xlu0 %264
    %v267 = vadd.f32 %v257, %v265
    %v268 = vtanh.pop %v267
    %270 = vrot.lane.b32.xlu0 %v268, 64
    %v271 = vpop.permute.xlu0 %270
    %v273 = vmul.f32 %v256, %v271
    %274 = vmatpush.msra.mxu0 0.0
    %275 = vmatpush.msra.mxu0 0.0
    %276 = vmatpush.msra.mxu0 0.0
    %277 = vmatpush.msra.mxu0 0.0
    %278 = vmatpush.msra.mxu0 0.0
    %279 = vmatpush.msra.mxu0 0.0
    %280 = vmatpush.msra.mxu0 0.0
    %281 = vmatpush.msra.mxu0 0.0
    %282 = vmatpush.msra.mxu0 0.0
    %283 = vmatpush.msra.mxu0 0.0
    %284 = vmatpush.msra.mxu0 0.0
    %285 = vmatpush.msra.mxu0 0.0
    %286 = vmatpush.msra.mxu0 %v220
    %287 = vmatpush.msra.mxu0 %v219
    %288 = vmatpush.msra.mxu0 %v218
    %289 = vmatpush.msra.mxu0 %v217
    %290 = vmatmul.f32.gmra.mxu0 %v230
    %v291 = vpop.f32.mrf.mxu0
    %v292 = vadd.f32 0.0, %v291
    %293 = vdwg.mxu0
    %v294 = vadd.f32 %v190, %v292
    %v295 = vtanh.pop %v294
    %297 = vrot.lane.b32.xlu0 %v273, 32
    %v298 = vpop.permute.xlu0 %297
    %v299 = vsel %vm228, %v298, 0
    %301 = vmatpush.msra.mxu0 0.0
    %302 = vmatpush.msra.mxu0 0.0
    %303 = vmatpush.msra.mxu0 0.0
    %304 = vmatpush.msra.mxu0 0.0
    %305 = vmatpush.msra.mxu0 0.0
    %306 = vmatpush.msra.mxu0 0.0
    %307 = vmatpush.msra.mxu0 0.0
    %308 = vmatpush.msra.mxu0 0.0
    %309 = vmatpush.msra.mxu0 0.0
    %310 = vmatpush.msra.mxu0 0.0
    %311 = vmatpush.msra.mxu0 0.0
    %312 = vmatpush.msra.mxu0 0.0
    %313 = vmatpush.msra.mxu0 %v216
    %314 = vmatpush.msra.mxu0 %v215
    %315 = vmatpush.msra.mxu0 %v214
    %316 = vmatpush.msra.mxu0 %v213
    %317 = vmatmul.f32.gmra.mxu0 %v299
    %v318 = vpop.f32.mrf.mxu0
    %v319 = vadd.f32 0.0, %v318
    %320 = vdwg.mxu0
    %v321 = vadd.f32 %v144, %v319
    %v322 = vmul.f32 %v321, %v226
    %v323 = vtanh.pop %v322
    %v324 = vmul.f32 %v323, %v226
    %v325 = vadd.f32 %v324, %v227
    %v326 = vmul.f32 %v325, %v267
    %328 = vrot.lane.b32.xlu0 %v325, 64
    %v329 = vpop.permute.xlu0 %328
    %v331 = vmul.f32 %v325, %v329
    %333 = vrot.lane.b32.xlu0 %v331, 32
    %v334 = vpop.permute.xlu0 %333
    %v336 = vadd.f32 %v326, %v334
    %v337 = vtanh.pop %v336
    %339 = vrot.lane.b32.xlu0 %v337, 64
    %v340 = vpop.permute.xlu0 %339
    %v342 = vmul.f32 %v325, %v340
    %v344 = vsel %vm228, %v295, 0
    %346 = vmatpush.msra.mxu0 0.0
    %347 = vmatpush.msra.mxu0 0.0
    %348 = vmatpush.msra.mxu0 0.0
    %349 = vmatpush.msra.mxu0 0.0
    %350 = vmatpush.msra.mxu0 0.0
    %351 = vmatpush.msra.mxu0 0.0
    %352 = vmatpush.msra.mxu0 0.0
    %353 = vmatpush.msra.mxu0 0.0
    %354 = vmatpush.msra.mxu0 0.0
    %355 = vmatpush.msra.mxu0 0.0
    %356 = vmatpush.msra.mxu0 0.0
    %357 = vmatpush.msra.mxu0 0.0
    %358 = vmatpush.msra.mxu0 %v220
    %359 = vmatpush.msra.mxu0 %v219
    %360 = vmatpush.msra.mxu0 %v218
    %361 = vmatpush.msra.mxu0 %v217
    %362 = vmatmul.f32.gmra.mxu0 %v344
    %v363 = vpop.f32.mrf.mxu0
    %v364 = vadd.f32 0.0, %v363
    %365 = vdwg.mxu0
    %v366 = vadd.f32 %v193, %v364
    %v367 = vtanh.pop %v366
    %369 = vrot.lane.b32.xlu0 %v342, 32
    %v370 = vpop.permute.xlu0 %369
    %v371 = vsel %vm228, %v370, 0
    %373 = vmatpush.msra.mxu0 0.0
    %374 = vmatpush.msra.mxu0 0.0
    %375 = vmatpush.msra.mxu0 0.0
    %376 = vmatpush.msra.mxu0 0.0
    %377 = vmatpush.msra.mxu0 0.0
    %378 = vmatpush.msra.mxu0 0.0
    %379 = vmatpush.msra.mxu0 0.0
    %380 = vmatpush.msra.mxu0 0.0
    %381 = vmatpush.msra.mxu0 0.0
    %382 = vmatpush.msra.mxu0 0.0
    %383 = vmatpush.msra.mxu0 0.0
    %384 = vmatpush.msra.mxu0 0.0
    %385 = vmatpush.msra.mxu0 %v216
    %386 = vmatpush.msra.mxu0 %v215
    %387 = vmatpush.msra.mxu0 %v214
    %388 = vmatpush.msra.mxu0 %v213
    %389 = vmatmul.f32.gmra.mxu0 %v371
    %v390 = vpop.f32.mrf.mxu0
    %v391 = vadd.f32 0.0, %v390
    %392 = vdwg.mxu0
    %v393 = vadd.f32 %v147, %v391
    %v394 = vmul.f32 %v393, %v226
    %v395 = vtanh.pop %v394
    %v396 = vmul.f32 %v395, %v226
    %v397 = vadd.f32 %v396, %v227
    %v398 = vmul.f32 %v397, %v336
    %400 = vrot.lane.b32.xlu0 %v397, 64
    %v401 = vpop.permute.xlu0 %400
    %v403 = vmul.f32 %v397, %v401
    %405 = vrot.lane.b32.xlu0 %v403, 32
    %v406 = vpop.permute.xlu0 %405
    %v408 = vadd.f32 %v398, %v406
    %v409 = vtanh.pop %v408
    %411 = vrot.lane.b32.xlu0 %v409, 64
    %v412 = vpop.permute.xlu0 %411
    %v414 = vmul.f32 %v397, %v412
    %v416 = vsel %vm228, %v367, 0
    %418 = vmatpush.msra.mxu0 0.0
    %419 = vmatpush.msra.mxu0 0.0
    %420 = vmatpush.msra.mxu0 0.0
    %421 = vmatpush.msra.mxu0 0.0
    %422 = vmatpush.msra.mxu0 0.0
    %423 = vmatpush.msra.mxu0 0.0
    %424 = vmatpush.msra.mxu0 0.0
    %425 = vmatpush.msra.mxu0 0.0
    %426 = vmatpush.msra.mxu0 0.0
    %427 = vmatpush.msra.mxu0 0.0
    %428 = vmatpush.msra.mxu0 0.0
    %429 = vmatpush.msra.mxu0 0.0
    %430 = vmatpush.msra.mxu0 %v220
    %431 = vmatpush.msra.mxu0 %v219
    %432 = vmatpush.msra.mxu0 %v218
    %433 = vmatpush.msra.mxu0 %v217
    %434 = vmatmul.f32.gmra.mxu0 %v416
    %v435 = vpop.f32.mrf.mxu0
    %v436 = vadd.f32 0.0, %v435
    %437 = vdwg.mxu0
    %v438 = vadd.f32 %v196, %v436
    %v439 = vtanh.pop %v438
    %441 = vrot.lane.b32.xlu0 %v414, 32
    %v442 = vpop.permute.xlu0 %441
    %v443 = vsel %vm228, %v442, 0
    %445 = vmatpush.msra.mxu0 0.0
    %446 = vmatpush.msra.mxu0 0.0
    %447 = vmatpush.msra.mxu0 0.0
    %448 = vmatpush.msra.mxu0 0.0
    %449 = vmatpush.msra.mxu0 0.0
    %450 = vmatpush.msra.mxu0 0.0
    %451 = vmatpush.msra.mxu0 0.0
    %452 = vmatpush.msra.mxu0 0.0
    %453 = vmatpush.msra.mxu0 0.0
    %454 = vmatpush.msra.mxu0 0.0
    %455 = vmatpush.msra.mxu0 0.0
    %456 = vmatpush.msra.mxu0 0.0
    %457 = vmatpush.msra.mxu0 %v216
    %458 = vmatpush.msra.mxu0 %v215
    %459 = vmatpush.msra.mxu0 %v214
    %460 = vmatpush.msra.mxu0 %v213
    %461 = vmatmul.f32.gmra.mxu0 %v443
    %v462 = vpop.f32.mrf.mxu0
    %v463 = vadd.f32 0.0, %v462
    %464 = vdwg.mxu0
    %v465 = vadd.f32 %v150, %v463
    %v466 = vmul.f32 %v465, %v226
    %v467 = vtanh.pop %v466
    %v468 = vmul.f32 %v467, %v226
    %v469 = vadd.f32 %v468, %v227
    %v470 = vmul.f32 %v469, %v408
    %472 = vrot.lane.b32.xlu0 %v469, 64
    %v473 = vpop.permute.xlu0 %472
    %v475 = vmul.f32 %v469, %v473
    %477 = vrot.lane.b32.xlu0 %v475, 32
    %v478 = vpop.permute.xlu0 %477
    %v480 = vadd.f32 %v470, %v478
    %v481 = vtanh.pop %v480
    %483 = vrot.lane.b32.xlu0 %v481, 64
    %v484 = vpop.permute.xlu0 %483
    %v486 = vmul.f32 %v469, %v484
    %v488 = vsel %vm228, %v439, 0
    %490 = vmatpush.msra.mxu0 0.0
    %491 = vmatpush.msra.mxu0 0.0
    %492 = vmatpush.msra.mxu0 0.0
    %493 = vmatpush.msra.mxu0 0.0
    %494 = vmatpush.msra.mxu0 0.0
    %495 = vmatpush.msra.mxu0 0.0
    %496 = vmatpush.msra.mxu0 0.0
    %497 = vmatpush.msra.mxu0 0.0
    %498 = vmatpush.msra.mxu0 0.0
    %499 = vmatpush.msra.mxu0 0.0
    %500 = vmatpush.msra.mxu0 0.0
    %501 = vmatpush.msra.mxu0 0.0
    %502 = vmatpush.msra.mxu0 %v220
    %503 = vmatpush.msra.mxu0 %v219
    %504 = vmatpush.msra.mxu0 %v218
    %505 = vmatpush.msra.mxu0 %v217
    %506 = vmatmul.f32.gmra.mxu0 %v488
    %v507 = vpop.f32.mrf.mxu0
    %v508 = vadd.f32 0.0, %v507
    %509 = vdwg.mxu0
    %v510 = vadd.f32 %v199, %v508
    %v511 = vtanh.pop %v510
    %513 = vrot.lane.b32.xlu0 %v486, 32
    %v514 = vpop.permute.xlu0 %513
    %v515 = vsel %vm228, %v514, 0
    %517 = vmatpush.msra.mxu0 0.0
    %518 = vmatpush.msra.mxu0 0.0
    %519 = vmatpush.msra.mxu0 0.0
    %520 = vmatpush.msra.mxu0 0.0
    %521 = vmatpush.msra.mxu0 0.0
    %522 = vmatpush.msra.mxu0 0.0
    %523 = vmatpush.msra.mxu0 0.0
    %524 = vmatpush.msra.mxu0 0.0
    %525 = vmatpush.msra.mxu0 0.0
    %526 = vmatpush.msra.mxu0 0.0
    %527 = vmatpush.msra.mxu0 0.0
    %528 = vmatpush.msra.mxu0 0.0
    %529 = vmatpush.msra.mxu0 %v216
    %530 = vmatpush.msra.mxu0 %v215
    %531 = vmatpush.msra.mxu0 %v214
    %532 = vmatpush.msra.mxu0 %v213
    %533 = vmatmul.f32.gmra.mxu0 %v515
    %v534 = vpop.f32.mrf.mxu0
    %v535 = vadd.f32 0.0, %v534
    %536 = vdwg.mxu0
    %v537 = vadd.f32 %v153, %v535
    %v538 = vmul.f32 %v537, %v226
    %v539 = vtanh.pop %v538
    %v540 = vmul.f32 %v539, %v226
    %v541 = vadd.f32 %v540, %v227
    %v542 = vmul.f32 %v541, %v480
    %544 = vrot.lane.b32.xlu0 %v541, 64
    %v545 = vpop.permute.xlu0 %544
    %v547 = vmul.f32 %v541, %v545
    %549 = vrot.lane.b32.xlu0 %v547, 32
    %v550 = vpop.permute.xlu0 %549
    %v552 = vadd.f32 %v542, %v550
    %v553 = vtanh.pop %v552
    %555 = vrot.lane.b32.xlu0 %v553, 64
    %v556 = vpop.permute.xlu0 %555
    %v558 = vmul.f32 %v541, %v556
    %v560 = vsel %vm228, %v511, 0
    %562 = vmatpush.msra.mxu0 0.0
    %563 = vmatpush.msra.mxu0 0.0
    %564 = vmatpush.msra.mxu0 0.0
    %565 = vmatpush.msra.mxu0 0.0
    %566 = vmatpush.msra.mxu0 0.0
    %567 = vmatpush.msra.mxu0 0.0
    %568 = vmatpush.msra.mxu0 0.0
    %569 = vmatpush.msra.mxu0 0.0
    %570 = vmatpush.msra.mxu0 0.0
    %571 = vmatpush.msra.mxu0 0.0
    %572 = vmatpush.msra.mxu0 0.0
    %573 = vmatpush.msra.mxu0 0.0
    %574 = vmatpush.msra.mxu0 %v220
    %575 = vmatpush.msra.mxu0 %v219
    %576 = vmatpush.msra.mxu0 %v218
    %577 = vmatpush.msra.mxu0 %v217
    %578 = vmatmul.f32.gmra.mxu0 %v560
    %v579 = vpop.f32.mrf.mxu0
    %v580 = vadd.f32 0.0, %v579
    %581 = vdwg.mxu0
    %v582 = vadd.f32 %v202, %v580
    %v583 = vtanh.pop %v582
    %585 = vrot.lane.b32.xlu0 %v558, 32
    %v586 = vpop.permute.xlu0 %585
    %v587 = vsel %vm228, %v586, 0
    %589 = vmatpush.msra.mxu0 0.0
    %590 = vmatpush.msra.mxu0 0.0
    %591 = vmatpush.msra.mxu0 0.0
    %592 = vmatpush.msra.mxu0 0.0
    %593 = vmatpush.msra.mxu0 0.0
    %594 = vmatpush.msra.mxu0 0.0
    %595 = vmatpush.msra.mxu0 0.0
    %596 = vmatpush.msra.mxu0 0.0
    %597 = vmatpush.msra.mxu0 0.0
    %598 = vmatpush.msra.mxu0 0.0
    %599 = vmatpush.msra.mxu0 0.0
    %600 = vmatpush.msra.mxu0 0.0
    %601 = vmatpush.msra.mxu0 %v216
    %602 = vmatpush.msra.mxu0 %v215
    %603 = vmatpush.msra.mxu0 %v214
    %604 = vmatpush.msra.mxu0 %v213
    %605 = vmatmul.f32.gmra.mxu0 %v587
    %v606 = vpop.f32.mrf.mxu0
    %v607 = vadd.f32 0.0, %v606
    %608 = vdwg.mxu0
    %v609 = vadd.f32 %v156, %v607
    %v610 = vmul.f32 %v609, %v226
    %v611 = vtanh.pop %v610
    %v612 = vmul.f32 %v611, %v226
    %v613 = vadd.f32 %v612, %v227
    %v614 = vmul.f32 %v613, %v552
    %616 = vrot.lane.b32.xlu0 %v613, 64
    %v617 = vpop.permute.xlu0 %616
    %v619 = vmul.f32 %v613, %v617
    %621 = vrot.lane.b32.xlu0 %v619, 32
    %v622 = vpop.permute.xlu0 %621
    %v624 = vadd.f32 %v614, %v622
    %v625 = vtanh.pop %v624
    %627 = vrot.lane.b32.xlu0 %v625, 64
    %v628 = vpop.permute.xlu0 %627
    %v630 = vmul.f32 %v613, %v628
    %v632 = vsel %vm228, %v583, 0
    %634 = vmatpush.msra.mxu0 0.0
    %635 = vmatpush.msra.mxu0 0.0
    %636 = vmatpush.msra.mxu0 0.0
    %637 = vmatpush.msra.mxu0 0.0
    %638 = vmatpush.msra.mxu0 0.0
    %639 = vmatpush.msra.mxu0 0.0
    %640 = vmatpush.msra.mxu0 0.0
    %641 = vmatpush.msra.mxu0 0.0
    %642 = vmatpush.msra.mxu0 0.0
    %643 = vmatpush.msra.mxu0 0.0
    %644 = vmatpush.msra.mxu0 0.0
    %645 = vmatpush.msra.mxu0 0.0
    %646 = vmatpush.msra.mxu0 %v220
    %647 = vmatpush.msra.mxu0 %v219
    %648 = vmatpush.msra.mxu0 %v218
    %649 = vmatpush.msra.mxu0 %v217
    %650 = vmatmul.f32.gmra.mxu0 %v632
    %v651 = vpop.f32.mrf.mxu0
    %v652 = vadd.f32 0.0, %v651
    %653 = vdwg.mxu0
    %v654 = vadd.f32 %v205, %v652
    %v655 = vtanh.pop %v654
    %657 = vrot.lane.b32.xlu0 %v630, 32
    %v658 = vpop.permute.xlu0 %657
    %v659 = vsel %vm228, %v658, 0
    %661 = vmatpush.msra.mxu0 0.0
    %662 = vmatpush.msra.mxu0 0.0
    %663 = vmatpush.msra.mxu0 0.0
    %664 = vmatpush.msra.mxu0 0.0
    %665 = vmatpush.msra.mxu0 0.0
    %666 = vmatpush.msra.mxu0 0.0
    %667 = vmatpush.msra.mxu0 0.0
    %668 = vmatpush.msra.mxu0 0.0
    %669 = vmatpush.msra.mxu0 0.0
    %670 = vmatpush.msra.mxu0 0.0
    %671 = vmatpush.msra.mxu0 0.0
    %672 = vmatpush.msra.mxu0 0.0
    %673 = vmatpush.msra.mxu0 %v216
    %674 = vmatpush.msra.mxu0 %v215
    %675 = vmatpush.msra.mxu0 %v214
    %676 = vmatpush.msra.mxu0 %v213
    %677 = vmatmul.f32.gmra.mxu0 %v659
    %v678 = vpop.f32.mrf.mxu0
    %v679 = vadd.f32 0.0, %v678
    %680 = vdwg.mxu0
    %v681 = vadd.f32 %v159, %v679
    %v682 = vmul.f32 %v681, %v226
    %v683 = vtanh.pop %v682
    %v684 = vmul.f32 %v683, %v226
    %v685 = vadd.f32 %v684, %v227
    %v686 = vmul.f32 %v685, %v624
    %688 = vrot.lane.b32.xlu0 %v685, 64
    %v689 = vpop.permute.xlu0 %688
    %v691 = vmul.f32 %v685, %v689
    %693 = vrot.lane.b32.xlu0 %v691, 32
    %v694 = vpop.permute.xlu0 %693
    %v696 = vadd.f32 %v686, %v694
    %v697 = vtanh.pop %v696
    %699 = vrot.lane.b32.xlu0 %v697, 64
    %v700 = vpop.permute.xlu0 %699
    %v702 = vmul.f32 %v685, %v700
    %v704 = vsel %vm228, %v655, 0
    %706 = vmatpush.msra.mxu0 0.0
    %707 = vmatpush.msra.mxu0 0.0
    %708 = vmatpush.msra.mxu0 0.0
    %709 = vmatpush.msra.mxu0 0.0
    %710 = vmatpush.msra.mxu0 0.0
    %711 = vmatpush.msra.mxu0 0.0
    %712 = vmatpush.msra.mxu0 0.0
    %713 = vmatpush.msra.mxu0 0.0
    %714 = vmatpush.msra.mxu0 0.0
    %715 = vmatpush.msra.mxu0 0.0
    %716 = vmatpush.msra.mxu0 0.0
    %717 = vmatpush.msra.mxu0 0.0
    %718 = vmatpush.msra.mxu0 %v220
    %719 = vmatpush.msra.mxu0 %v219
    %720 = vmatpush.msra.mxu0 %v218
    %721 = vmatpush.msra.mxu0 %v217
    %722 = vmatmul.f32.gmra.mxu0 %v704
    %v723 = vpop.f32.mrf.mxu0
    %v724 = vadd.f32 0.0, %v723
    %725 = vdwg.mxu0
    %v726 = vadd.f32 %v208, %v724
    %v727 = vtanh.pop %v726
    %729 = vrot.lane.b32.xlu0 %v702, 32
    %v730 = vpop.permute.xlu0 %729
    %v731 = vsel %vm228, %v730, 0
    %733 = vmatpush.msra.mxu0 0.0
    %734 = vmatpush.msra.mxu0 0.0
    %735 = vmatpush.msra.mxu0 0.0
    %736 = vmatpush.msra.mxu0 0.0
    %737 = vmatpush.msra.mxu0 0.0
    %738 = vmatpush.msra.mxu0 0.0
    %739 = vmatpush.msra.mxu0 0.0
    %740 = vmatpush.msra.mxu0 0.0
    %741 = vmatpush.msra.mxu0 0.0
    %742 = vmatpush.msra.mxu0 0.0
    %743 = vmatpush.msra.mxu0 0.0
    %744 = vmatpush.msra.mxu0 0.0
    %745 = vmatpush.msra.mxu0 %v216
    %746 = vmatpush.msra.mxu0 %v215
    %747 = vmatpush.msra.mxu0 %v214
    %748 = vmatpush.msra.mxu0 %v213
    %749 = vmatmul.f32.gmra.mxu0 %v731
    %v750 = vpop.f32.mrf.mxu0
    %v751 = vadd.f32 0.0, %v750
    %752 = vdwg.mxu0
    %v753 = vadd.f32 %v162, %v751
    %v754 = vmul.f32 %v753, %v226
    %v755 = vtanh.pop %v754
    %v756 = vmul.f32 %v755, %v226
    %v757 = vadd.f32 %v756, %v227
    %v758 = vmul.f32 %v757, %v696
    %760 = vrot.lane.b32.xlu0 %v757, 64
    %v761 = vpop.permute.xlu0 %760
    %v763 = vmul.f32 %v757, %v761
    %765 = vrot.lane.b32.xlu0 %v763, 32
    %v766 = vpop.permute.xlu0 %765
    %v768 = vadd.f32 %v758, %v766
    %v769 = vtanh.pop %v768
    %771 = vrot.lane.b32.xlu0 %v769, 64
    %v772 = vpop.permute.xlu0 %771
    %v774 = vmul.f32 %v757, %v772
    %v776 = vsel %vm228, %v727, 0
    %778 = vmatpush.msra.mxu0 0.0
    %779 = vmatpush.msra.mxu0 0.0
    %780 = vmatpush.msra.mxu0 0.0
    %781 = vmatpush.msra.mxu0 0.0
    %782 = vmatpush.msra.mxu0 0.0
    %783 = vmatpush.msra.mxu0 0.0
    %784 = vmatpush.msra.mxu0 0.0
    %785 = vmatpush.msra.mxu0 0.0
    %786 = vmatpush.msra.mxu0 0.0
    %787 = vmatpush.msra.mxu0 0.0
    %788 = vmatpush.msra.mxu0 0.0
    %789 = vmatpush.msra.mxu0 0.0
    %790 = vmatpush.msra.mxu0 %v220
    %791 = vmatpush.msra.mxu0 %v219
    %792 = vmatpush.msra.mxu0 %v218
    %793 = vmatpush.msra.mxu0 %v217
    %794 = vmatmul.f32.gmra.mxu0 %v776
    %v795 = vpop.f32.mrf.mxu0
    %v796 = vadd.f32 0.0, %v795
    %797 = vdwg.mxu0
    %v798 = vadd.f32 %v211, %v796
    %v799 = vtanh.pop %v798
    %801 = vrot.lane.b32.xlu0 %v342, 64
    %v802 = vpop.permute.xlu0 %801
    %804 = vrot.lane.b32.xlu0 %v414, 96
    %v805 = vpop.permute.xlu0 %804
    %808 = vrot.lane.b32.xlu0 %v630, 64
    %v809 = vpop.permute.xlu0 %808
    %811 = vrot.lane.b32.xlu0 %v702, 96
    %v812 = vpop.permute.xlu0 %811
    %v814 = vsel %vm228, %v298, %v802
    %vm815 = vcmask 523264
    %v816 = vsel %vm815, %v814, %v805
    %vm817 = vcmask 785408
    %v818 = vsel %vm817, %v816, %v486
    %v819 = vsel %vm228, %v586, %v809
    %v820 = vsel %vm815, %v819, %v812
    %v821 = vsel %vm817, %v820, %v774
    %v822 = vld [vmem:[#allocation5] sm:$0xff]
    %v823 = vld [vmem:[#allocation5 + $0x8] sm:$0xff]
    %v824 = vld [vmem:[#allocation5 + $0x10] sm:$0xff]
    %v825 = vld [vmem:[#allocation5 + $0x18] sm:$0xff]
    %v826 = vld [vmem:[#allocation5 + $0x20] sm:$0xff]
    %v827 = vld [vmem:[#allocation5 + $0x28] sm:$0xff]
    %v828 = vld [vmem:[#allocation5 + $0x30] sm:$0xff]
    %v829 = vld [vmem:[#allocation5 + $0x38] sm:$0xff]
    %v830 = vld [vmem:[#allocation5 + $0x40] sm:$0xff]
    %v831 = vld [vmem:[#allocation5 + $0x48] sm:$0xff]
    %v832 = vld [vmem:[#allocation5 + $0x50] sm:$0xff]
    %v833 = vld [vmem:[#allocation5 + $0x58] sm:$0xff]
    %v834 = vld [vmem:[#allocation5 + $0x60] sm:$0xff]
    %v835 = vld [vmem:[#allocation5 + $0x68] sm:$0xff]
    %v836 = vld [vmem:[#allocation5 + $0x70] sm:$0xff]
    %v837 = vld [vmem:[#allocation5 + $0x78] sm:$0xff]
    %v838 = vld [vmem:[#allocation5 + $0x80] sm:$0xff]
    %v839 = vld [vmem:[#allocation5 + $0x88] sm:$0xff]
    %v840 = vld [vmem:[#allocation5 + $0x90] sm:$0xff]
    %v841 = vld [vmem:[#allocation5 + $0x98] sm:$0xff]
    %v842 = vld [vmem:[#allocation5 + $0xa0] sm:$0xff]
    %v843 = vld [vmem:[#allocation5 + $0xa8] sm:$0xff]
    %v844 = vld [vmem:[#allocation5 + $0xb0] sm:$0xff]
    %v845 = vld [vmem:[#allocation5 + $0xb8] sm:$0xff]
    %v846 = vld [vmem:[#allocation5 + $0xc0] sm:$0xff]
    %v847 = vld [vmem:[#allocation5 + $0xc8] sm:$0xff]
    %v848 = vld [vmem:[#allocation5 + $0xd0] sm:$0xff]
    %v849 = vld [vmem:[#allocation5 + $0xd8] sm:$0xff]
    %v850 = vld [vmem:[#allocation5 + $0xe0] sm:$0xff]
    %v851 = vld [vmem:[#allocation5 + $0xe8] sm:$0xff]
    %v852 = vld [vmem:[#allocation5 + $0xf0] sm:$0xff]
    %v853 = vld [vmem:[#allocation5 + $0xf8] sm:$0xff]
    %v854 = vld [vmem:[#allocation7] sm:$0xff]
    %v855 = vld [vmem:[#allocation7 + $0x8] sm:$0xff]
    %v856 = vld [vmem:[#allocation7 + $0x10] sm:$0xff]
    %v857 = vld [vmem:[#allocation7 + $0x18] sm:$0xff]
    %v859 = vsel %vm228, %v799, 0
    %861 = vmatpush.msra.mxu0 0.0
    %862 = vmatpush.msra.mxu0 0.0
    %863 = vmatpush.msra.mxu0 0.0
    %864 = vmatpush.msra.mxu0 0.0
    %865 = vmatpush.msra.mxu0 0.0
    %866 = vmatpush.msra.mxu0 0.0
    %867 = vmatpush.msra.mxu0 0.0
    %868 = vmatpush.msra.mxu0 0.0
    %869 = vmatpush.msra.mxu0 0.0
    %870 = vmatpush.msra.mxu0 0.0
    %871 = vmatpush.msra.mxu0 0.0
    %872 = vmatpush.msra.mxu0 0.0
    %873 = vmatpush.msra.mxu0 %v857
    %874 = vmatpush.msra.mxu0 %v856
    %875 = vmatpush.msra.mxu0 %v855
    %876 = vmatpush.msra.mxu0 %v854
    %877 = vmatmul.f32.gmra.mxu0 %v859
    %v878 = vpop.f32.mrf.mxu0
    %v879 = vadd.f32 0.0, %v878
    %880 = vdwg.mxu0
    %881 = vmatpush.msra.mxu0 %v837
    %882 = vmatpush.msra.mxu0 %v836
    %883 = vmatpush.msra.mxu0 %v835
    %884 = vmatpush.msra.mxu0 %v834
    %885 = vmatpush.msra.mxu0 %v833
    %886 = vmatpush.msra.mxu0 %v832
    %887 = vmatpush.msra.mxu0 %v831
    %888 = vmatpush.msra.mxu0 %v830
    %889 = vmatpush.msra.mxu0 %v829
    %890 = vmatpush.msra.mxu0 %v828
    %891 = vmatpush.msra.mxu0 %v827
    %892 = vmatpush.msra.mxu0 %v826
    %893 = vmatpush.msra.mxu0 %v825
    %894 = vmatpush.msra.mxu0 %v824
    %895 = vmatpush.msra.mxu0 %v823
    %896 = vmatpush.msra.mxu0 %v822
    %897 = vmatmul.f32.gmra.mxu0 %v818
    %v898 = vpop.f32.mrf.mxu0
    %v899 = vadd.f32 %v879, %v898
    %900 = vdwg.mxu0
    %901 = vmatpush.msra.mxu0 %v853
    %902 = vmatpush.msra.mxu0 %v852
    %903 = vmatpush.msra.mxu0 %v851
    %904 = vmatpush.msra.mxu0 %v850
    %905 = vmatpush.msra.mxu0 %v849
    %906 = vmatpush.msra.mxu0 %v848
    %907 = vmatpush.msra.mxu0 %v847
    %908 = vmatpush.msra.mxu0 %v846
    %909 = vmatpush.msra.mxu0 %v845
    %910 = vmatpush.msra.mxu0 %v844
    %911 = vmatpush.msra.mxu0 %v843
    %912 = vmatpush.msra.mxu0 %v842
    %913 = vmatpush.msra.mxu0 %v841
    %914 = vmatpush.msra.mxu0 %v840
    %915 = vmatpush.msra.mxu0 %v839
    %916 = vmatpush.msra.mxu0 %v838
    %917 = vmatmul.f32.gmra.mxu0 %v821
    %v918 = vpop.f32.mrf.mxu0
    %v919 = vadd.f32 %v899, %v918
    %920 = vdwg.mxu0
    %v921 = vld [vmem:[%s9] sm:$0x1]
    %v923 = vperm.slane %v921, 0
    %v925 = vadd.f32 %v919, %v923
    %926 = vst [vmem:[#allocation8] sm:$0xff] %v925
    // Predicated region
    $region54: #{tpu_custom_call.1} parent=1 // pred_check
      _
    $region55: #{tpu_custom_call.1} parent=1 // pred_check_branch
      %928 = sbr.rel (0) target = $region57
    $region56: #{tpu_custom_call.1} parent=1 // pred_region
      %930 = vsyncadd [#allocation4], 0
      %s932 = sshll.u32 [#allocation8], 4
      %s933 = int_to_ptr.vmem [resolvable:$true] %s932
      %s934 = sshll.u32 %s10, 4
      %s935 = int_to_ptr.hbm [resolvable:$true] %s934
      %937 = dma.vmem_to_hbm [thread:$0]  %s933, 128, %s935, [#allocation4]
    $region57: #{tpu_custom_call.1} parent=1 // pred_fallthru
      _
    // Predicated region
    $region58: #{tpu_custom_call.1} parent=1 // pred_check
      _
    $region59: #{tpu_custom_call.1} parent=1 // pred_check_branch
      %939 = sbr.rel (0) target = $region61
    $region60: #{tpu_custom_call.1} parent=1 // pred_region
      %941 = dma.done [#allocation4], 128
    $region61: #{tpu_custom_call.1} parent=1 // pred_fallthru
      _
    %942 = vsyncpa [#allocation3], 1
    %943 = vsyncpa [#allocation6], 1
    %944 = vsyncpa [#allocation4], 1

</llo_original>
